<compile_context>
chip_gen: v5e
topology: v5e:2x2
jax: 0.10.0
libtpu: 0.0.40
codegen_flags: <defaults>
</compile_context>

<pallas_src>
import functools
import math

import jax
import jax.numpy as jnp
from jax import lax
from jax.experimental import pallas as pl
from jax.experimental.pallas import tpu as pltpu


# ---------------------------------------------------------------------------
# Kernels
# ---------------------------------------------------------------------------

def _flat_kernel(f, t, shift_ref, x_ref, o_ref):
    """Path A: (F, T) flattened into one lane-dense axis of length F*T.

    shift_ref: SMEM int32[1] (rows to shift down, in [1, shift_pitch]);
    x_ref / o_ref: VMEM (nb, F*T).
    """
    s = shift_ref[0]
    ft = x_ref.shape[1]
    x = x_ref[...]                                   # native dtype, no casts
    # Shifting the (F, T) slab down by s rows == rolling the flattened row by
    # s*T lanes.  Wrapped lanes are exactly the masked-to-zero ones, so the
    # modulo keeps the roll amount in range without changing the result.
    rolled = pltpu.roll(x, (s % f) * t, axis=1)
    # Single-row iota; compare/select broadcast over the nb rows (no full
    # nb x F*T iota, no materialized zeros tensor).
    lane = lax.broadcasted_iota(jnp.int32, (1, ft), 1)
    o_ref[...] = jnp.where(lane >= s * t, rolled, 0)


def _rows_kernel(f, shift_ref, x_ref, o_ref):
    """Path B (T lane-dense): input viewed as (B*C*F, T).  Blocks start at
    slab boundaries and span whole (F, T) slabs (block rows are a multiple of
    F), so the pitch shift is one dynamic sublane roll + sublane-iota mask.

    shift_ref: SMEM int32[1]; x_ref / o_ref: VMEM (k*F, tT).
    """
    s = shift_ref[0]
    rows = x_ref.shape[0]
    x = x_ref[...]
    rolled = pltpu.roll(x, s % f, axis=0)            # rolled[i] = x[(i - s) % rows]
    # Rows whose in-slab index is < s are the zero-padded rows of the
    # reference (rolled there holds wrapped / wrong-slab data -> masked).
    row = lax.broadcasted_iota(jnp.int32, (rows, 1), 0)
    o_ref[...] = jnp.where((row % f) >= s, rolled, 0)


# ---------------------------------------------------------------------------
# Generation-aware block sizing
# ---------------------------------------------------------------------------

def _tpu_vmem_bytes():
    try:
        return int(pltpu.get_tpu_info().vmem_capacity_bytes)
    except Exception:
        return 128 * 1024 * 1024                      # v5e / v6e default


def _block_budget():
    vmem = _tpu_vmem_bytes()
    if vmem <= 64 * 1024 * 1024:                      # v7x-class: 64 MiB / TC
        return 3 * 1024 * 1024, 48 * 1024 * 1024
    return 6 * 1024 * 1024, 64 * 1024 * 1024          # v5e / v6e: 128 MiB


# ---------------------------------------------------------------------------
# Wrapper
# ---------------------------------------------------------------------------

def random_pitch_shift(x, shift_pitch, key, *, donate_input=False):
    """x: (B, C, F, T) -> same shape/dtype, randomly pitch-shifted along F."""
    assert shift_pitch >= 1
    b, c, f, t = x.shape
    bc = b * c

    # Same draw as the PyTorch module: left ~ U[0, shift_pitch).
    left = jax.random.randint(key, (1,), 0, shift_pitch, dtype=jnp.int32)
    shift_rows = jnp.asarray(shift_pitch, jnp.int32) - left   # in [1, shift_pitch]

    itemsize = x.dtype.itemsize
    sub_mult = max(8, 32 // itemsize)        # native sublane tile: 8/16/32
    target_bytes, vmem_limit = _block_budget()

    # Each output block depends only on the same block of x, so aliasing is
    # safe; off by default so callers may keep using x afterwards.
    alias = {1: 0} if donate_input else {}

    if t % 128 == 0 and f % 8 == 0:
        # ---- Path B: keep T lane-dense, shift via sublane roll -------------
        total_rows = bc * f
        x2 = x.reshape(total_rows, t)        # free reshape (adjacent dims)

        # Lane tiling keeps a single slab within budget even for huge T.
        tt = t
        if f * t * itemsize > target_bytes:
            tt = max(128, (target_bytes // (f * itemsize)) // 128 * 128)
            tt = min(tt, t)
        # Rows per block: whole slabs (multiple of F), and when possible a
        # multiple of the dtype's sublane tile.
        k_align = sub_mult // math.gcd(f, sub_mult)
        k = max(1, target_bytes // (f * tt * itemsize))
        k = max(k_align, (k // k_align) * k_align)
        rows = min(f * k, total_rows)

        grid = (pl.cdiv(total_rows, rows), pl.cdiv(t, tt))
        out2 = pl.pallas_call(
            functools.partial(_rows_kernel, f),
            out_shape=jax.ShapeDtypeStruct((total_rows, t), x.dtype),
            grid_spec=pltpu.PrefetchScalarGridSpec(
                num_scalar_prefetch=1,
                grid=grid,
                in_specs=[pl.BlockSpec((rows, tt), lambda i, j, shift: (i, j))],
                out_specs=pl.BlockSpec((rows, tt), lambda i, j, shift: (i, j)),
            ),
            compiler_params=pltpu.CompilerParams(
                # TODO(synk): on v7x verify both TensorCores are used; if the
                # trace shows one TC, switch the leading axis to
                # pltpu.CORE_PARALLEL (string "parallel" is a codegen no-op).
                dimension_semantics=("parallel", "parallel"),
                vmem_limit_bytes=vmem_limit,
            ),
            input_output_aliases=alias,
        )(shift_rows, x2)
        return out2.reshape(b, c, f, t)

    # ---- Path A: small / odd T -> flatten (F, T) into one lane axis --------
    ft = f * t
    x2 = x.reshape(bc, ft)
    row_bytes = ((ft + 127) // 128) * 128 * itemsize
    nb = max(1, target_bytes // row_bytes)
    if nb >= bc:
        nb = bc
    elif nb >= sub_mult:
        nb = (nb // sub_mult) * sub_mult
    else:
        nb = min(bc, 8)                       # BlockSpec needs an 8-row multiple
        # TODO(synk): for huge F*T with T not a multiple of 128, also tile the
        # lane axis instead of accepting an oversized block.

    grid = (pl.cdiv(bc, nb),)
    out2 = pl.pallas_call(
        functools.partial(_flat_kernel, f, t),
        out_shape=jax.ShapeDtypeStruct((bc, ft), x.dtype),
        grid_spec=pltpu.PrefetchScalarGridSpec(
            num_scalar_prefetch=1,
            grid=grid,
            in_specs=[pl.BlockSpec((nb, ft), lambda i, shift: (i, 0))],
            out_specs=pl.BlockSpec((nb, ft), lambda i, shift: (i, 0)),
        ),
        compiler_params=pltpu.CompilerParams(
            dimension_semantics=("parallel",),
            vmem_limit_bytes=vmem_limit,
        ),
        input_output_aliases=alias,
    )(shift_rows, x2)
    return out2.reshape(b, c, f, t)


# ---------------------------------------------------------------------------
# Pure-JAX reference (mirror of the PyTorch forward, same randint draw)
# ---------------------------------------------------------------------------

def _reference(x, shift_pitch, key):
    left = int(jax.random.randint(key, (1,), 0, shift_pitch, dtype=jnp.int32)[0])
    f = x.shape[-2]
    padded = jnp.pad(x, ((0, 0), (0, 0), (shift_pitch, shift_pitch), (0, 0)))
    return padded[..., left:left + f, :]


if __name__ == "__main__":
    key = jax.random.PRNGKey(0)
    k1, k2, k3, k4 = jax.random.split(key, 4)

    # Path A: small T (flattened lane-roll layout), the module's test shape.
    B, C, F, T = 2, 4, 16, 16
    shift_pitch = 2
    x = jax.random.normal(k1, (B, C, F, T), dtype=jnp.float32)
    out = jax.block_until_ready(random_pitch_shift(x, shift_pitch, k2))
    ref = _reference(x, shift_pitch, k2)
    assert out.shape == x.shape and out.dtype == x.dtype
    assert jnp.array_equal(out, ref)

    # Path B: lane-dense T (sublane-roll layout).
    x2 = jax.random.normal(k3, (2, 2, 16, 128), dtype=jnp.float32)
    out2 = jax.block_until_ready(random_pitch_shift(x2, 3, k4))
    ref2 = _reference(x2, 3, k4)
    assert out2.shape == x2.shape and out2.dtype == x2.dtype
    assert jnp.array_equal(out2, ref2)

    print("KERNEL_OK")
</pallas_src>

<mosaic_0001>
module attributes {stable_mosaic.version = 11 : i64} {
  func.func @_flat_kernel(%arg0: i32, %arg1: memref<1xi32, #tpu.memory_space<smem>>, %arg2: memref<8x256xf32, #tpu.memory_space<vmem>>, %arg3: memref<8x256xf32, #tpu.memory_space<vmem>>) attributes {dimension_semantics = [#tpu.dimension_semantics<parallel>], iteration_bounds = array<i64: 1>, scalar_prefetch = 1 : i64, scratch_operands = 0 : i64, tpu.core_type = #tpu.core_type<tc>, window_params = [{transform_indices = @transform_0, window_bounds = array<i64: 8, 256>}, {transform_indices = @transform_1, window_bounds = array<i64: 8, 256>}]} {
    %c0 = arith.constant 0 : index
    %0 = memref.load %arg1[%c0] : memref<1xi32, #tpu.memory_space<smem>>
    %c0_0 = arith.constant 0 : index
    %c0_1 = arith.constant 0 : index
    %1 = vector.load %arg2[%c0_0, %c0_1] : memref<8x256xf32, #tpu.memory_space<vmem>>, vector<8x256xf32>
    %c16_i32 = arith.constant 16 : i32
    %c0_i32 = arith.constant 0 : i32
    %2 = arith.cmpi eq, %c16_i32, %c0_i32 : i32
    %c1_i32 = arith.constant 1 : i32
    %3 = arith.select %2, %c1_i32, %c16_i32 : i32
    %4 = arith.remsi %0, %3 : i32
    %c0_i32_2 = arith.constant 0 : i32
    %5 = arith.cmpi ne, %4, %c0_i32_2 : i32
    %c0_i32_3 = arith.constant 0 : i32
    %6 = arith.cmpi slt, %4, %c0_i32_3 : i32
    %c0_i32_4 = arith.constant 0 : i32
    %7 = arith.cmpi slt, %3, %c0_i32_4 : i32
    %8 = arith.xori %6, %7 : i1
    %9 = arith.andi %8, %5 : i1
    %10 = arith.addi %4, %3 : i32
    %11 = arith.select %9, %10, %4 : i32
    %c16_i32_5 = arith.constant 16 : i32
    %12 = arith.muli %11, %c16_i32_5 : i32
    %13 = tpu.dynamic_rotate %1 by %12 dim 1 : vector<8x256xf32>, i32 -> vector<8x256xf32>
    %14 = tpu.iota {dimensions = array<i32: 1>} : vector<1x256xi32>
    %c16_i32_6 = arith.constant 16 : i32
    %15 = arith.muli %0, %c16_i32_6 : i32
    %16 = vector.broadcast %15 : i32 to vector<1x256xi32>
    %17 = arith.cmpi sge, %14, %16 : vector<1x256xi32>
    %c0_i32_7 = arith.constant 0 : i32
    %18 = arith.sitofp %c0_i32_7 : i32 to f32
    %19 = vector.shape_cast %17 : vector<1x256xi1> to vector<1x256xi1>
    %20 = vector.broadcast %19 : vector<1x256xi1> to vector<8x256xi1>
    %21 = vector.broadcast %18 : f32 to vector<8x256xf32>
    %22 = arith.select %20, %13, %21 : vector<8x256xi1>, vector<8x256xf32>
    %c0_8 = arith.constant 0 : index
    %c0_9 = arith.constant 0 : index
    %23 = vector.load %arg3[%c0_8, %c0_9] : memref<8x256xf32, #tpu.memory_space<vmem>>, vector<8x256xf32>
    tpu.vector_store %arg3[%c0_8, %c0_9], %22 {strides = array<i32>} : memref<8x256xf32, #tpu.memory_space<vmem>>, vector<8x256xf32>,
    return
  }
  func.func @transform_0(%arg0: i32, %arg1: memref<1xi32, #tpu.memory_space<smem>>) -> (i32, i32) {
    %c0_i32 = arith.constant 0 : i32
    %c0_i32_0 = arith.constant 0 : i32
    return %arg0, %c0_i32 : i32, i32
  }
  func.func @transform_1(%arg0: i32, %arg1: memref<1xi32, #tpu.memory_space<smem>>) -> (i32, i32) {
    %c0_i32 = arith.constant 0 : i32
    %c0_i32_0 = arith.constant 0 : i32
    return %arg0, %c0_i32 : i32, i32
  }
}

</mosaic_0001>

<llo_original>
// kernel: tpu_custom_call.1
$region0: #{tpu_custom_call.1}
  #allocation0 [shape = 'u32[]', space=smem, size = 0x4, offset = 0x4, fixed_abs, tag = 'smem constant byte address 0x4 - core index']
  #allocation1 [shape = 'u32[72,128]{1,0:T(1,128)}', space=vmem, size = 0x9000, scoped, tag = 'internal scratch']
  #allocation2 [shape = 's32[1]{0}', space=sflag, size = 0x4, scoped, tag = 'scoped memory for tpu_custom_call.1']
  #allocation3 [shape = 's32[1]{0:T(128)S(6)}', space=smem, size = 0x200, scoped, tag = 'prefetched SMEM operand 0']
  %s0 = inlined_call_operand.<no memory space> [shape: s32[1], index: 0, kind: input, shape index: {}]
  %s1 = inlined_call_operand.hbm [shape: f32[8,256], index: 1, kind: input, shape index: {}]
  %s2 = inlined_call_operand.hbm [shape: f32[8,256], index: 2, kind: output, shape index: {}]
  %s3 = sld [smem:[#allocation0]]
  $region18: #{tpu_custom_call.1} parent=0
    _
  %s5 = ssub.s32 1, %s3
  %s6 = scalar_select 0, %s5, %s3
  %7 = sst [smem:[#allocation3]] %s0
  $region1: #{tpu_custom_call.1} parent=0
    #allocation4 [shape = 'u8[8192]{0}', space=vmem, size = 0x2000, scoped, tag = 'input window, operand 1, single buffered']
    #allocation5 [shape = 's32[1]{0}', space=sflag, size = 0x4, scoped, tag = 'scoped memory for tpu_custom_call.1']
    #allocation6 [shape = 's32[1]{0}', space=sflag, size = 0x4, scoped, tag = 'scoped memory for tpu_custom_call.1']
    #allocation7 [shape = 'u8[8192]{0}', space=vmem, size = 0x2000, scoped, tag = 'output window, operand 0, single buffered']
    %8 = vsyncpa [#allocation5], 0
    %9 = vsyncpa [#allocation6], 0
    // Predicated region
    $region2: #{tpu_custom_call.1} parent=1 // pred_check
      _
    $region3: #{tpu_custom_call.1} parent=1 // pred_check_branch
      %11 = sbr.rel (0) target = $region5
    $region4: #{tpu_custom_call.1} parent=1 // pred_region
      %13 = vsyncadd [#allocation5], 0
      %s15 = sshll.u32 %s1, 4
      %s16 = int_to_ptr.hbm [resolvable:$true] %s15
      %s17 = sshll.u32 [#allocation4], 4
      %s18 = int_to_ptr.vmem [resolvable:$true] %s17
      %20 = dma.hbm_to_vmem [thread:$0]  %s16, 256, %s18, [#allocation5]
    $region5: #{tpu_custom_call.1} parent=1 // pred_fallthru
      _
    // Predicated region
    $region6: #{tpu_custom_call.1} parent=1 // pred_check
      _
    $region7: #{tpu_custom_call.1} parent=1 // pred_check_branch
      %22 = sbr.rel (0) target = $region9
    $region8: #{tpu_custom_call.1} parent=1 // pred_region
      %24 = dma.done [#allocation5], 256
    $region9: #{tpu_custom_call.1} parent=1 // pred_fallthru
      _
    %s25 = sld [smem:[#allocation3]]
    %v26 = vld [vmem:[#allocation4] sm:$0xff]
    %v27 = vld [vmem:[#allocation4 + $0x8] sm:$0xff]
    %p28 = scmp.lt.s32.totalorder %s25, 0
    %s29 = ssub.s32 0, %s25
    %s30 = scalar_select %p28, %s29, %s25
    %s31 = sand.u32 %s30, 15
    %s32 = ssub.s32 0, %s31
    %s33 = scalar_select %p28, %s32, %s31
    %p34 = scmp.ne.s32.totalorder %s33, 0
    %p35 = scmp.lt.s32.totalorder %s33, 0
    %p36 = pnand %p35, %p34
    %p37 = pneg %p36
    %s38 = sadd.s32 %s33, 16
    %s39 = scalar_select %p37, %s38, %s33
    %s40 = smul.u32 %s39, 16
    %s41 = sand.u32 %s40, 255
    %s42 = sand.u32 %s41, 127
    %s43 = sshrl.u32 %s41, 7
    %44 = vrot.lane.b32.xlu0 %v26, %s42
    %v45 = vpop.permute.xlu0 %44
    %46 = vrot.lane.b32.xlu0 %v27, %s42
    %v47 = vpop.permute.xlu0 %46
    %v48 = vstv %s42
    %v49 = vlaneseq
    %v50 = vand.u32 %v49, 127
    %vm51 = vcmp.lt.s32.totalorder %v50, %v48
    %v52 = vsel %vm51, %v45, %v47
    %v53 = vsel %vm51, %v47, %v45
    %s54 = sand.u32 %s43, 1
    %v55 = vstv %s54
    %vm56 = vcmp.ne.s32.totalorder %v55, 0
    %v57 = vsel %vm56, %v52, %v53
    %v58 = vsel %vm56, %v53, %v52
    %v59 = vadd.s32 %v50, 128
    %s60 = smul.u32 %s25, 16
    %v61 = vstv %s60
    %vm62 = vcmp.ge.s32.totalorder %v50, %v61
    %vm63 = vcmp.ge.s32.totalorder %v59, %v61
    %v64 = vsel %vm62, 1, 0
    %v65 = vsel %vm63, 1, 0
    %vm66 = vcmp.eq.s32.totalorder %v64, 1
    %vm67 = vcmp.eq.s32.totalorder %v65, 1
    %v68 = vsel %vm66, %v57, 0.0
    %v69 = vsel %vm67, %v58, 0.0
    %70 = vst [vmem:[#allocation7] sm:$0xff] %v68
    %71 = vst [vmem:[#allocation7 + $0x8] sm:$0xff] %v69
    // Predicated region
    $region10: #{tpu_custom_call.1} parent=1 // pred_check
      _
    $region11: #{tpu_custom_call.1} parent=1 // pred_check_branch
      %73 = sbr.rel (0) target = $region13
    $region12: #{tpu_custom_call.1} parent=1 // pred_region
      %75 = vsyncadd [#allocation6], 0
      %s77 = sshll.u32 [#allocation7], 4
      %s78 = int_to_ptr.vmem [resolvable:$true] %s77
      %s79 = sshll.u32 %s2, 4
      %s80 = int_to_ptr.hbm [resolvable:$true] %s79
      %82 = dma.vmem_to_hbm [thread:$0]  %s78, 256, %s80, [#allocation6]
    $region13: #{tpu_custom_call.1} parent=1 // pred_fallthru
      _
    // Predicated region
    $region14: #{tpu_custom_call.1} parent=1 // pred_check
      _
    $region15: #{tpu_custom_call.1} parent=1 // pred_check_branch
      %84 = sbr.rel (0) target = $region17
    $region16: #{tpu_custom_call.1} parent=1 // pred_region
      %86 = dma.done [#allocation6], 256
    $region17: #{tpu_custom_call.1} parent=1 // pred_fallthru
      _
    %87 = vsyncpa [#allocation5], 1
    %88 = vsyncpa [#allocation6], 1

</llo_original>
